<compile_context>
chip_gen: v5e
topology: v5e:2x2
jax: 0.10.0
libtpu: 0.0.40
codegen_flags: <defaults>
</compile_context>

<pallas_src>
import functools
import math

import jax
import jax.numpy as jnp
from jax.experimental import pallas as pl
from jax.experimental.pallas import tpu as pltpu

_LANES = 128
_SUBLANES = 8


def _mixup_soft_ce_kernel(off_val, on_scale, b_real, tb_rows, mask_rows,
                          logits_ref, tgt_ref, beta_ref, out_ref):
    x = logits_ref[...].astype(jnp.float32)            # (TB, C)
    tb, c = x.shape

    # --- log_softmax along the class (lane) axis ---
    m = jnp.max(x, axis=1, keepdims=True)
    z = x - m
    lse = jnp.log(jnp.sum(jnp.exp(z), axis=1, keepdims=True))
    logp = z - lse                                      # (TB, C)

    col = jax.lax.broadcasted_iota(jnp.int32, (tb, c), 1)
    ta = tgt_ref[:, 0:1]                                # (TB, 1)
    tb_t = tgt_ref[:, 1:2]                              # (TB, 1)
    beta = beta_ref[0]

    # logp gathered at target_a / target_b via one-lane selects + XLU reduces.
    row_a = jnp.sum(jnp.where(col == ta, logp, 0.0), axis=1, keepdims=True)
    row_b = jnp.sum(jnp.where(col == tb_t, logp, 0.0), axis=1, keepdims=True)
    row_mix = beta * row_a + (1.0 - beta) * row_b       # (TB, 1)

    if off_val != 0.0:
        row_base = jnp.sum(logp, axis=1, keepdims=True)  # (TB, 1)
    else:
        row_base = None

    if mask_rows:
        # Tail rows of the last partial block hold undefined VMEM data -> mask
        # the per-row sums with a select (never 0 * inf/NaN).
        row = (jax.lax.broadcasted_iota(jnp.int32, (tb, 1), 0)
               + pl.program_id(0) * tb_rows)
        valid = row < b_real
        row_mix = jnp.where(valid, row_mix, 0.0)
        if row_base is not None:
            row_base = jnp.where(valid, row_base, 0.0)

    partial = jnp.float32(on_scale) * jnp.sum(row_mix)
    if row_base is not None:
        partial = partial + jnp.float32(off_val) * jnp.sum(row_base)

    # Aligned (1,8,128) writeback of the broadcast scalar partial.
    out_ref[...] = jnp.full((1, _SUBLANES, _LANES), partial, dtype=jnp.float32)


def _round_up(x, m):
    return ((x + m - 1) // m) * m


def _auto_block_rows(c, in_bytes):
    # Live VMEM ~ 2 double-buffered input tiles + ~6 f32 full-tile temps.
    budget = 20 * 1024 * 1024                 # safe under v7x 32 MiB scoped VMEM
    per_row = c * (2 * in_bytes + 6 * 4)
    rows = budget // max(per_row, 1)
    rows = max(8, min(1024, (rows // 8) * 8))
    return rows


def mixup_soft_ce_loss(logits, target_a, target_b, beta,
                       num_class=None, label_smooth=0.0, block_rows=None):
    """Pallas implementation of MixupSoftCELoss.forward (batchmean KLDiv)."""
    B, C = logits.shape
    if num_class is None:
        num_class = C
    assert 0.0 <= label_smooth <= 1.0

    on_val = 1.0 - label_smooth
    off_val = (label_smooth / (num_class - 1)) if num_class > 1 else 0.0
    on_scale = on_val - off_val
    # Constant per-row entropy sum_c t*log(t) of the smoothed one-hot (PyTorch
    # KLDivLoss treats t==0 terms as 0): one lane at on_val, C-1 lanes at off_val.
    h_const = 0.0
    if on_val > 0.0:
        h_const += on_val * math.log(on_val)
    if off_val > 0.0:
        h_const += (C - 1) * off_val * math.log(off_val)

    in_bytes = jnp.dtype(logits.dtype).itemsize
    if block_rows is None:
        block_rows = _auto_block_rows(C, in_bytes)

    # ---- tiling: lane-dense full-extent class axis, batch tiled on sublanes ----
    if B <= _SUBLANES:
        tb_rows = B                                   # single full-extent tile
    else:
        half = _round_up(-(-B // 2), _SUBLANES)       # >=2 steps -> v7x megacore
        tb_rows = max(_SUBLANES, min(block_rows, half))
    grid = (pl.cdiv(B, tb_rows),)
    mask_rows = grid[0] * tb_rows != B

    tgt = jnp.stack([target_a.astype(jnp.int32),
                     target_b.astype(jnp.int32)], axis=1)        # (B, 2)
    beta_arr = jnp.asarray(beta, dtype=jnp.float32).reshape(1)

    kernel = functools.partial(
        _mixup_soft_ce_kernel, float(off_val), float(on_scale),
        B, tb_rows, mask_rows)

    partials = pl.pallas_call(
        kernel,
        out_shape=jax.ShapeDtypeStruct((grid[0], _SUBLANES, _LANES), jnp.float32),
        grid=grid,
        in_specs=[
            pl.BlockSpec((tb_rows, C), lambda i: (i, 0)),        # logits tile
            pl.BlockSpec((tb_rows, 2), lambda i: (i, 0)),        # (target_a, target_b)
            pl.BlockSpec(memory_space=pltpu.MemorySpace.SMEM),   # beta scalar
        ],
        out_specs=pl.BlockSpec((1, _SUBLANES, _LANES), lambda i: (i, 0, 0)),
        compiler_params=pltpu.CompilerParams(
            dimension_semantics=("parallel",)),                  # batch tiles independent
    )(logits, tgt, beta_arr)

    total = jnp.sum(partials[:, 0, 0])
    return h_const - total / B


def _reference_loss(logits, target_a, target_b, beta, label_smooth):
    """Pure-JAX reference matching PyTorch semantics (for verification)."""
    B, C = logits.shape
    logp = jax.nn.log_softmax(logits.astype(jnp.float32), axis=1)

    def onehot(t):
        oh = jnp.full((B, C), label_smooth / (C - 1), jnp.float32)
        return oh.at[jnp.arange(B), t].set(1.0 - label_smooth)

    def kl(t):
        safe = jnp.where(t > 0.0, t, 1.0)
        pt = jnp.where(t > 0.0, t * (jnp.log(safe) - logp), 0.0)
        return jnp.sum(pt) / B

    return beta * kl(onehot(target_a)) + (1.0 - beta) * kl(onehot(target_b))


if __name__ == "__main__":
    key = jax.random.PRNGKey(0)
    k1, k2, k3, k4, k5, k6 = jax.random.split(key, 6)

    # Test 1: single tile, C < 128 (full-extent lane dim), label smoothing on.
    B, C = 8, 32
    logits = jax.random.normal(k1, (B, C), dtype=jnp.float32)
    target_a = jax.random.randint(k2, (B,), 0, C, dtype=jnp.int32)
    target_b = jax.random.randint(k3, (B,), 0, C, dtype=jnp.int32)
    loss = jax.block_until_ready(
        mixup_soft_ce_loss(logits, target_a, target_b, 0.7, label_smooth=0.1))
    ref = _reference_loss(logits, target_a, target_b, 0.7, 0.1)
    assert jnp.allclose(loss, ref, rtol=1e-5, atol=1e-5), (loss, ref)

    # Test 2: gridded batch with a partial tail block (24 rows, tiles of 16),
    # no label smoothing (base-term pass skipped at compile time).
    B2, C2 = 24, 40
    logits2 = jax.random.normal(k4, (B2, C2), dtype=jnp.float32)
    ta2 = jax.random.randint(k5, (B2,), 0, C2, dtype=jnp.int32)
    tb2 = jax.random.randint(k6, (B2,), 0, C2, dtype=jnp.int32)
    loss2 = jax.block_until_ready(
        mixup_soft_ce_loss(logits2, ta2, tb2, 0.3, label_smooth=0.0, block_rows=16))
    ref2 = _reference_loss(logits2, ta2, tb2, 0.3, 0.0)
    assert jnp.allclose(loss2, ref2, rtol=1e-5, atol=1e-5), (loss2, ref2)

    # Test 3: bf16 logits in native dtype, auto block_rows (splits batch in 2).
    logits3 = logits2.astype(jnp.bfloat16)
    loss3 = jax.block_until_ready(
        mixup_soft_ce_loss(logits3, ta2, tb2, 0.5, label_smooth=0.05))
    ref3 = _reference_loss(logits3, ta2, tb2, 0.5, 0.05)
    assert jnp.allclose(loss3, ref3, rtol=1e-4, atol=1e-4), (loss3, ref3)

    print("KERNEL_OK")
</pallas_src>

<mosaic_0001>
module attributes {stable_mosaic.version = 11 : i64} {
  func.func @_mixup_soft_ce_kernel(%arg0: i32, %arg1: memref<8x32xf32, #tpu.memory_space<vmem>>, %arg2: memref<8x2xi32, #tpu.memory_space<vmem>>, %arg3: memref<1xf32, #tpu.memory_space<smem>>, %arg4: memref<1x8x128xf32, #tpu.memory_space<vmem>>) attributes {dimension_semantics = [#tpu.dimension_semantics<parallel>], iteration_bounds = array<i64: 1>, scalar_prefetch = 0 : i64, scratch_operands = 0 : i64, tpu.core_type = #tpu.core_type<tc>, window_params = [{transform_indices = @transform_0, window_bounds = array<i64: 8, 32>}, {transform_indices = @transform_1, window_bounds = array<i64: 8, 2>}, {transform_indices = @transform_2, window_bounds = array<i64: 1>}, {transform_indices = @transform_3, window_bounds = array<i64: 1, 8, 128>}]} {
    %c0 = arith.constant 0 : index
    %c0_0 = arith.constant 0 : index
    %0 = vector.load %arg1[%c0, %c0_0] : memref<8x32xf32, #tpu.memory_space<vmem>>, vector<8x32xf32>
    %cst = arith.constant dense<0xFF800000> : vector<8xf32>
    %1 = vector.multi_reduction <maximumf>, %0, %cst [1] : vector<8x32xf32> to vector<8xf32>
    %2 = vector.shape_cast %1 : vector<8xf32> to vector<8x1xf32>
    %3 = vector.broadcast %2 : vector<8x1xf32> to vector<8x32xf32>
    %4 = arith.subf %0, %3 : vector<8x32xf32>
    %5 = math.exp %4 : vector<8x32xf32>
    %cst_1 = arith.constant dense<0.000000e+00> : vector<8xf32>
    %6 = vector.multi_reduction <add>, %5, %cst_1 [1] : vector<8x32xf32> to vector<8xf32>
    %7 = vector.shape_cast %6 : vector<8xf32> to vector<8x1xf32>
    %8 = math.log %7 : vector<8x1xf32>
    %9 = vector.broadcast %8 : vector<8x1xf32> to vector<8x32xf32>
    %10 = arith.subf %4, %9 : vector<8x32xf32>
    %11 = tpu.iota {dimensions = array<i32: 1>} : vector<8x32xi32>
    %c0_2 = arith.constant 0 : index
    %c0_3 = arith.constant 0 : index
    %12 = vector.load %arg2[%c0_2, %c0_3] : memref<8x2xi32, #tpu.memory_space<vmem>>, vector<8x1xi32>
    %c0_4 = arith.constant 0 : index
    %c1 = arith.constant 1 : index
    %13 = vector.load %arg2[%c0_4, %c1] : memref<8x2xi32, #tpu.memory_space<vmem>>, vector<8x1xi32>
    %c0_5 = arith.constant 0 : index
    %14 = memref.load %arg3[%c0_5] : memref<1xf32, #tpu.memory_space<smem>>
    %15 = vector.broadcast %12 : vector<8x1xi32> to vector<8x32xi32>
    %16 = arith.cmpi eq, %11, %15 : vector<8x32xi32>
    %cst_6 = arith.constant 0.000000e+00 : f32
    %17 = vector.broadcast %cst_6 : f32 to vector<8x32xf32>
    %18 = arith.select %16, %10, %17 : vector<8x32xi1>, vector<8x32xf32>
    %cst_7 = arith.constant dense<0.000000e+00> : vector<8xf32>
    %19 = vector.multi_reduction <add>, %18, %cst_7 [1] : vector<8x32xf32> to vector<8xf32>
    %20 = vector.shape_cast %19 : vector<8xf32> to vector<8x1xf32>
    %21 = vector.broadcast %13 : vector<8x1xi32> to vector<8x32xi32>
    %22 = arith.cmpi eq, %11, %21 : vector<8x32xi32>
    %cst_8 = arith.constant 0.000000e+00 : f32
    %23 = vector.broadcast %cst_8 : f32 to vector<8x32xf32>
    %24 = arith.select %22, %10, %23 : vector<8x32xi1>, vector<8x32xf32>
    %cst_9 = arith.constant dense<0.000000e+00> : vector<8xf32>
    %25 = vector.multi_reduction <add>, %24, %cst_9 [1] : vector<8x32xf32> to vector<8xf32>
    %26 = vector.shape_cast %25 : vector<8xf32> to vector<8x1xf32>
    %27 = vector.broadcast %14 : f32 to vector<8x1xf32>
    %28 = arith.mulf %27, %20 : vector<8x1xf32>
    %cst_10 = arith.constant 1.000000e+00 : f32
    %29 = arith.subf %cst_10, %14 : f32
    %30 = vector.broadcast %29 : f32 to vector<8x1xf32>
    %31 = arith.mulf %30, %26 : vector<8x1xf32>
    %32 = arith.addf %28, %31 : vector<8x1xf32>
    %cst_11 = arith.constant dense<0.000000e+00> : vector<8xf32>
    %33 = vector.multi_reduction <add>, %10, %cst_11 [1] : vector<8x32xf32> to vector<8xf32>
    %34 = vector.shape_cast %33 : vector<8xf32> to vector<8x1xf32>
    %35 = vector.shape_cast %32 : vector<8x1xf32> to vector<1x8x1xf32>
    %cst_12 = arith.constant dense<0.000000e+00> : vector<1xf32>
    %36 = vector.multi_reduction <add>, %35, %cst_12 [1, 2] : vector<1x8x1xf32> to vector<1xf32>
    %37 = vector.shape_cast %36 : vector<1xf32> to vector<1x1x1xf32>
    %38 = vector.extract %37[0, 0, 0] : f32 from vector<1x1x1xf32>
    %cst_13 = arith.constant 0.896774172 : f32
    %39 = arith.mulf %cst_13, %38 : f32
    %40 = vector.shape_cast %34 : vector<8x1xf32> to vector<1x8x1xf32>
    %cst_14 = arith.constant dense<0.000000e+00> : vector<1xf32>
    %41 = vector.multi_reduction <add>, %40, %cst_14 [1, 2] : vector<1x8x1xf32> to vector<1xf32>
    %42 = vector.shape_cast %41 : vector<1xf32> to vector<1x1x1xf32>
    %43 = vector.extract %42[0, 0, 0] : f32 from vector<1x1x1xf32>
    %cst_15 = arith.constant 0.0032258064 : f32
    %44 = arith.mulf %cst_15, %43 : f32
    %45 = arith.addf %39, %44 : f32
    %46 = vector.broadcast %45 : f32 to vector<1x8x128xf32>
    %c0_16 = arith.constant 0 : index
    %c0_17 = arith.constant 0 : index
    %c0_18 = arith.constant 0 : index
    %47 = vector.load %arg4[%c0_16, %c0_17, %c0_18] : memref<1x8x128xf32, #tpu.memory_space<vmem>>, vector<1x8x128xf32>
    tpu.vector_store %arg4[%c0_16, %c0_17, %c0_18], %46 {strides = array<i32>} : memref<1x8x128xf32, #tpu.memory_space<vmem>>, vector<1x8x128xf32>,
    return
  }
  func.func @transform_0(%arg0: i32) -> (i32, i32) {
    %c0_i32 = arith.constant 0 : i32
    %c0_i32_0 = arith.constant 0 : i32
    return %arg0, %c0_i32 : i32, i32
  }
  func.func @transform_1(%arg0: i32) -> (i32, i32) {
    %c0_i32 = arith.constant 0 : i32
    %c0_i32_0 = arith.constant 0 : i32
    return %arg0, %c0_i32 : i32, i32
  }
  func.func @transform_2(%arg0: i32) -> i32 {
    %c0_i32 = arith.constant 0 : i32
    %c0_i32_0 = arith.constant 0 : i32
    return %c0_i32 : i32
  }
  func.func @transform_3(%arg0: i32) -> (i32, i32, i32) {
    %c0_i32 = arith.constant 0 : i32
    %c0_i32_0 = arith.constant 0 : i32
    %c0_i32_1 = arith.constant 0 : i32
    return %arg0, %c0_i32, %c0_i32_0 : i32, i32, i32
  }
}

</mosaic_0001>

<llo_original>
// kernel: tpu_custom_call.1
$region0: #{tpu_custom_call.1}
  #allocation0 [shape = 'u32[]', space=smem, size = 0x4, offset = 0x4, fixed_abs, tag = 'smem constant byte address 0x4 - core index']
  #allocation1 [shape = 'u32[72,128]{1,0:T(1,128)}', space=vmem, size = 0x9000, scoped, tag = 'internal scratch']
  #allocation2 [shape = 'f32[1]{0:T(128)S(6)}', space=smem, size = 0x200, scoped, tag = 'scoped memory for tpu_custom_call.1']
  %s0 = inlined_call_operand.vmem [shape: f32[8,32], index: 0, kind: input, shape index: {}]
  %s1 = inlined_call_operand.vmem [shape: s32[8,2], index: 1, kind: input, shape index: {}]
  %s2 = inlined_call_operand.<no memory space> [shape: f32[1], index: 2, kind: input, shape index: {}]
  %s3 = inlined_call_operand.hbm [shape: f32[1,8,128], index: 3, kind: output, shape index: {}]
  %s4 = sld [smem:[#allocation0]]
  $region22: #{tpu_custom_call.1} parent=0
    _
  %s6 = ssub.s32 1, %s4
  %s7 = scalar_select 0, %s6, %s4
  %8 = sst [smem:[#allocation2]] %s2
  $region1: #{tpu_custom_call.1} parent=0
    #allocation3 [shape = 'u8[4096]{0}', space=vmem, size = 0x1000, scoped, tag = 'output window, operand 0, single buffered']
    #allocation4 [shape = 's32[1]{0}', space=sflag, size = 0x4, scoped, tag = 'scoped memory for tpu_custom_call.1']
    %9 = vsyncpa [#allocation4], 0
    // Predicated region
    $region2: #{tpu_custom_call.1} parent=1 // pred_check
      _
    $region3: #{tpu_custom_call.1} parent=1 // pred_check_branch
      %11 = sbr.rel (0) target = $region5
    $region4: #{tpu_custom_call.1} parent=1 // pred_region
      _
    $region5: #{tpu_custom_call.1} parent=1 // pred_fallthru
      _
    // Predicated region
    $region6: #{tpu_custom_call.1} parent=1 // pred_check
      _
    $region7: #{tpu_custom_call.1} parent=1 // pred_check_branch
      %13 = sbr.rel (0) target = $region9
    $region8: #{tpu_custom_call.1} parent=1 // pred_region
      _
    $region9: #{tpu_custom_call.1} parent=1 // pred_fallthru
      _
    // Predicated region
    $region10: #{tpu_custom_call.1} parent=1 // pred_check
      _
    $region11: #{tpu_custom_call.1} parent=1 // pred_check_branch
      %15 = sbr.rel (0) target = $region13
    $region12: #{tpu_custom_call.1} parent=1 // pred_region
      _
    $region13: #{tpu_custom_call.1} parent=1 // pred_fallthru
      _
    %v16 = vld [vmem:[%s0] sm:$0xff]
    %vm17 = vcmask 261120
    %v18 = vsel %vm17, %v16, -inf
    %19 = vmax.xlane.f32.xlu0 %v18
    %v20 = vpop.xlane.xlu0 %19
    %v21 = vsub.f32 %v16, %v20
    %v22 = vmul.f32 %v21, 1.442695
    %v23 = vpow.pop %v22
    %v24 = vsel %vm17, %v23, 0.0
    %25 = vadd.xlane.f32.xlu0 %v24
    %v26 = vpop.xlane.xlu0 %25
    %v27 = vlog2.pop %v26
    %v28 = vmul.f32 %v27, 0.6931472
    %v29 = vsub.f32 %v21, %v28
    %v30 = vlaneseq
    %v31 = vand.u32 %v30, 127
    %v32 = vld [vmem:[%s1] sm:$0xff]
    %s33 = sld [smem:[#allocation2]]
    %34 = vset.pattern.permute.xlu0 0
    %35 = vperm.xlu0 %34, %v32
    %v36 = vpop.permute.xlu0 %35
    %vm37 = vcmp.eq.s32.totalorder %v31, %v36
    %v38 = vsel %vm37, %v29, 0.0
    %v39 = vsel %vm17, %v38, 0.0
    %40 = vadd.xlane.f32.xlu0 %v39
    %v41 = vpop.xlane.xlu0 %40
    %42 = vset.pattern.permute.xlu0 1
    %43 = vperm.xlu0 %42, %v32
    %v44 = vpop.permute.xlu0 %43
    %vm45 = vcmp.eq.s32.totalorder %v31, %v44
    %v46 = vsel %vm45, %v29, 0.0
    %v47 = vsel %vm17, %v46, 0.0
    %48 = vadd.xlane.f32.xlu0 %v47
    %v49 = vpop.xlane.xlu0 %48
    %v50 = vstv %s33
    %v51 = vmul.f32 %v50, %v41
    %s52 = ssub.f32 1.0, %s33
    %v53 = vstv %s52
    %v54 = vmul.f32 %v53, %v49
    %v55 = vadd.f32 %v51, %v54
    %v56 = vsel %vm17, %v29, 0.0
    %57 = vadd.xlane.f32.xlu0 %v56
    %v58 = vpop.xlane.xlu0 %57
    %vm59 = vcmask 7168
    %v60 = vsel %vm59, %v55, 0.0
    %61 = vadd.xlane.f32.xlu0 %v60
    %v62 = vpop.xlane.xlu0 %61
    %v63 = vrot.slane %v62, 4
    %v64 = vadd.f32 %v62, %v63
    %v65 = vrot.slane %v64, 2
    %v66 = vadd.f32 %v64, %v65
    %v67 = vrot.slane %v66, 1
    %v68 = vadd.f32 %v66, %v67
    %s69 = vtos %v68
    %s70 = smul.f32 %s69, 0.8967742
    %v71 = vsel %vm59, %v58, 0.0
    %72 = vadd.xlane.f32.xlu0 %v71
    %v73 = vpop.xlane.xlu0 %72
    %v74 = vrot.slane %v73, 4
    %v75 = vadd.f32 %v73, %v74
    %v76 = vrot.slane %v75, 2
    %v77 = vadd.f32 %v75, %v76
    %v78 = vrot.slane %v77, 1
    %v79 = vadd.f32 %v77, %v78
    %s80 = vtos %v79
    %s81 = smul.f32 %s80, 0.0032258064
    %s82 = sadd.f32 %s70, %s81
    %v83 = vstv %s82
    %84 = vst [vmem:[#allocation3] sm:$0xff] %v83
    // Predicated region
    $region14: #{tpu_custom_call.1} parent=1 // pred_check
      _
    $region15: #{tpu_custom_call.1} parent=1 // pred_check_branch
      %86 = sbr.rel (0) target = $region17
    $region16: #{tpu_custom_call.1} parent=1 // pred_region
      %88 = vsyncadd [#allocation4], 0
      %s90 = sshll.u32 [#allocation3], 4
      %s91 = int_to_ptr.vmem [resolvable:$true] %s90
      %s92 = sshll.u32 %s3, 4
      %s93 = int_to_ptr.hbm [resolvable:$true] %s92
      %95 = dma.vmem_to_hbm [thread:$0]  %s91, 128, %s93, [#allocation4]
    $region17: #{tpu_custom_call.1} parent=1 // pred_fallthru
      _
    // Predicated region
    $region18: #{tpu_custom_call.1} parent=1 // pred_check
      _
    $region19: #{tpu_custom_call.1} parent=1 // pred_check_branch
      %97 = sbr.rel (0) target = $region21
    $region20: #{tpu_custom_call.1} parent=1 // pred_region
      %99 = dma.done [#allocation4], 128
    $region21: #{tpu_custom_call.1} parent=1 // pred_fallthru
      _
    %100 = vsyncpa [#allocation4], 1

</llo_original>
